<compile_context>
chip_gen: v7x
topology: tpu7x:2x2x1
jax: 0.10.0
libtpu: 0.0.40
codegen_flags: <defaults>
</compile_context>

<pallas_src>
import functools

import jax
import jax.numpy as jnp
from jax import lax
from jax.experimental import pallas as pl
from jax.experimental.pallas import tpu as pltpu


_HALO = 128  # lane-aligned halo columns on each side of an Lp tile (needs >= 3)


def _dblock_kernel(x_ref, mask_ref, w1_ref, w2_ref, wr_ref, b_ref, out_ref,
                   *, t_out, fold1, fold2, compute_dtype):
    W = x_ref.shape[-1]
    pooled = x_ref[0, 0]                      # (C_in, W), compute dtype
    mask = mask_ref[0]                        # (1, W), f32 (1 where global col valid)
    b1 = b_ref[0]                             # (C_out, 1) f32
    b2 = b_ref[1]
    br = b_ref[2]

    # Residual branch: pointwise conv and average pooling commute exactly,
    # so it is a 1x1 matmul on the pooled activations.
    res = jnp.dot(wr_ref[...], pooled, preferred_element_type=jnp.float32) + br

    def conv3(w_ref, h, bias, r, fold):
        # "same"-padded k=3 conv with dilation r.  Tap shifts are along the
        # lane (non-contracted) axis, so rolls commute with the matmul; the
        # >= 128-column halo makes wrapped edge columns irrelevant for every
        # column that feeds the stored output range.
        if fold:
            # Fold the 3 taps into the contraction dim: one MXU push, K = 3*C.
            hcat = jnp.concatenate(
                [pltpu.roll(h, shift=r, axis=1), h,
                 pltpu.roll(h, shift=W - r, axis=1)], axis=0)
            return jnp.dot(w_ref[...], hcat,
                           preferred_element_type=jnp.float32) + bias
        # Large-channel form: 3 matmuls, roll the (cheaper) outputs.
        z0 = jnp.dot(w_ref[0], h, preferred_element_type=jnp.float32)
        z1 = jnp.dot(w_ref[1], h, preferred_element_type=jnp.float32)
        z2 = jnp.dot(w_ref[2], h, preferred_element_type=jnp.float32)
        y = z1 + bias
        y = y + pltpu.roll(z0, shift=r, axis=1)        # tap at offset -r
        y = y + pltpu.roll(z2, shift=W - r, axis=1)    # tap at offset +r
        return y

    h = jnp.maximum(pooled, 0)                # ReLU; zero padding stays zero
    y1 = conv3(w1_ref, h, b1, 1, fold1)
    # Zero padding of the dilated conv at the *global* sequence edges: the
    # bias makes y1 nonzero there, so multiply by the precomputed 0/1 mask.
    h2 = (jnp.maximum(y1, 0.0) * mask).astype(compute_dtype)
    main = conv3(w2_ref, h2, b2, 2, fold2)

    y = main + res
    # Store only the tile's own (halo-free) columns; offset is lane-aligned.
    out_ref[0] = y[:, _HALO:_HALO + t_out].astype(out_ref.dtype)


def dblock_forward(x, w1, b1, w2, b2, wr, br, downsample_factor, *,
                   compute_dtype=jnp.float32, block_lp=512, fold_threshold=256):
    """x: (N, C_in, L).  Returns (N, C_out, L // downsample_factor) float32.

    compute_dtype=jnp.bfloat16 DMAs bf16 activations and runs MXU matmuls in
    bf16 with f32 accumulation (recommended on v6e/v7x).  block_lp is the
    pooled-length tile width (multiple of 128); fold_threshold controls when
    the 3 conv taps are folded into the contraction dim (use 128 on v5e).
    """
    N, C_in, L = x.shape
    d = int(downsample_factor)
    C_out = w1.shape[0]
    Lp = L // d                    # PyTorch AvgPool1d truncates trailing samples
    if Lp == 0:
        return jnp.zeros((N, C_out, 0), jnp.float32)

    # ---- prologue (XLA): AvgPool1d, then cast to the DMA/compute dtype ----
    pooled = (x[:, :, :Lp * d].astype(jnp.float32)
              .reshape(N, C_in, Lp, d).mean(axis=-1))          # (N, C_in, Lp)
    pooled = pooled.astype(compute_dtype)

    # ---- Lp tiling with a 128-column halo on each side (overlapping tiles
    # materialized once here so the kernel uses plain Blocked BlockSpecs) ----
    T = max(128, min((int(block_lp) // 128) * 128, ((Lp + 127) // 128) * 128))
    n_tiles = -(-Lp // T)
    Lp_pad = n_tiles * T
    W = T + 2 * _HALO
    ext = jnp.pad(pooled, ((0, 0), (0, 0), (_HALO, Lp_pad - Lp + _HALO)))
    x_tiles = jnp.stack([ext[:, :, t * T: t * T + W] for t in range(n_tiles)],
                        axis=1)                                # (N, nt, C_in, W)

    # 0/1 validity mask (global column in [0, Lp)) in tile-local coordinates.
    g = jnp.arange(W)[None, :] - _HALO + T * jnp.arange(n_tiles)[:, None]
    mask = ((g >= 0) & (g < Lp)).astype(jnp.float32)[:, None, :]   # (nt, 1, W)

    # ---- weights (tap-folded when channels underfill the MXU) ----
    fold1 = C_in < fold_threshold
    fold2 = C_out < fold_threshold
    if fold1:
        w1k = jnp.concatenate([w1[:, :, 0], w1[:, :, 1], w1[:, :, 2]],
                              axis=1).astype(compute_dtype)    # (C_out, 3*C_in)
        w1_spec = pl.BlockSpec((C_out, 3 * C_in), lambda n, t: (0, 0))
    else:
        w1k = jnp.transpose(w1, (2, 0, 1)).astype(compute_dtype)  # (3,Co,Ci)
        w1_spec = pl.BlockSpec((3, C_out, C_in), lambda n, t: (0, 0, 0))
    if fold2:
        w2k = jnp.concatenate([w2[:, :, 0], w2[:, :, 1], w2[:, :, 2]],
                              axis=1).astype(compute_dtype)    # (C_out, 3*C_out)
        w2_spec = pl.BlockSpec((C_out, 3 * C_out), lambda n, t: (0, 0))
    else:
        w2k = jnp.transpose(w2, (2, 0, 1)).astype(compute_dtype)
        w2_spec = pl.BlockSpec((3, C_out, C_out), lambda n, t: (0, 0, 0))
    wrk = wr[:, :, 0].astype(compute_dtype)                    # (C_out, C_in)
    b_all = jnp.stack([b1, b2, br]).reshape(3, C_out, 1).astype(jnp.float32)

    # ---- VMEM budget: double-buffered blocks + weights + in-kernel temps ----
    cdb = jnp.dtype(compute_dtype).itemsize
    per_step = (2 * (C_in * W * cdb + W * 4 + C_out * T * 4)
                + (3 * C_out * (C_in + C_out) + C_out * C_in) * cdb
                + 3 * C_out * 4
                + (4 * C_in + 4 * C_out) * W * cdb             # h + hcat temps
                + 5 * C_out * W * 4)                           # f32 temporaries
    # Clamp so the limit stays safe on v7x (64 MiB/TC); shrink block_lp if the
    # estimate approaches the cap for very large channel counts.
    vmem_limit = int(min(max(2 * per_step, 16 * 2 ** 20), 48 * 2 ** 20))

    kernel = functools.partial(_dblock_kernel, t_out=T, fold1=fold1,
                               fold2=fold2, compute_dtype=compute_dtype)

    grid_spec = pltpu.PrefetchScalarGridSpec(
        num_scalar_prefetch=0,
        grid=(N, n_tiles),
        in_specs=[
            pl.BlockSpec((1, 1, C_in, W), lambda n, t: (n, t, 0, 0)),
            pl.BlockSpec((1, 1, W), lambda n, t: (t, 0, 0)),
            w1_spec,
            w2_spec,
            pl.BlockSpec((C_out, C_in), lambda n, t: (0, 0)),
            pl.BlockSpec((3, C_out, 1), lambda n, t: (0, 0, 0)),
        ],
        out_specs=pl.BlockSpec((1, C_out, T), lambda n, t: (n, 0, t)),
    )

    out = pl.pallas_call(
        kernel,
        out_shape=jax.ShapeDtypeStruct((N, C_out, Lp_pad), jnp.float32),
        grid_spec=grid_spec,
        compiler_params=pltpu.CompilerParams(
            dimension_semantics=("parallel", "parallel"),
            vmem_limit_bytes=vmem_limit),
    )(x_tiles, mask, w1k, w2k, wrk, b_all)

    if Lp_pad != Lp:
        out = out[:, :, :Lp]   # only when Lp is not a multiple of the tile width
    return out


def dblock_reference(x, w1, b1, w2, b2, wr, br, d):
    """Pure-JAX reference matching the PyTorch forward."""
    N, C_in, L = x.shape
    Lp = L // d
    x = x[:, :, :Lp * d]
    dn = ('NCH', 'OIH', 'NCH')
    pool = x.reshape(N, C_in, Lp, d).mean(-1)
    h = jax.nn.relu(pool)
    y = lax.conv_general_dilated(h, w1, (1,), [(1, 1)],
                                 dimension_numbers=dn) + b1[None, :, None]
    y = jax.nn.relu(y)
    y = lax.conv_general_dilated(y, w2, (1,), [(2, 2)], rhs_dilation=(2,),
                                 dimension_numbers=dn) + b2[None, :, None]
    r = lax.conv_general_dilated(x, wr, (1,), [(0, 0)],
                                 dimension_numbers=dn) + br[None, :, None]
    r = r.reshape(N, -1, Lp, d).mean(-1)
    return y + r


if __name__ == "__main__":
    key = jax.random.PRNGKey(0)
    kx, k1, k2, k3, k4, k5, k6, kx2 = jax.random.split(key, 8)

    # --- small test (single Lp tile) ---
    N, C_in, C_out, L, downsample = 2, 4, 8, 16, 2
    x = jax.random.normal(kx, (N, C_in, L), dtype=jnp.float32)
    w1 = 0.2 * jax.random.normal(k1, (C_out, C_in, 3), dtype=jnp.float32)
    b1 = 0.1 * jax.random.normal(k2, (C_out,), dtype=jnp.float32)
    w2 = 0.2 * jax.random.normal(k3, (C_out, C_out, 3), dtype=jnp.float32)
    b2 = 0.1 * jax.random.normal(k4, (C_out,), dtype=jnp.float32)
    wr = 0.2 * jax.random.normal(k5, (C_out, C_in, 1), dtype=jnp.float32)
    br = 0.1 * jax.random.normal(k6, (C_out,), dtype=jnp.float32)

    ref = dblock_reference(x, w1, b1, w2, b2, wr, br, downsample)

    out = jax.block_until_ready(
        dblock_forward(x, w1, b1, w2, b2, wr, br, downsample))
    assert out.shape == (N, C_out, L // downsample)
    assert jnp.allclose(out, ref, rtol=1e-4, atol=1e-4), (
        f"f32 max abs err {jnp.max(jnp.abs(out - ref))}")

    # bf16 activations / matmuls (f32 accumulation).
    out_bf16 = jax.block_until_ready(
        dblock_forward(x, w1, b1, w2, b2, wr, br, downsample,
                       compute_dtype=jnp.bfloat16))
    assert jnp.allclose(out_bf16, ref, rtol=1e-1, atol=1e-1), (
        f"bf16 max abs err {jnp.max(jnp.abs(out_bf16 - ref))}")

    # Unfolded (3-matmul + roll) path, as used for large channel counts.
    out_uf = jax.block_until_ready(
        dblock_forward(x, w1, b1, w2, b2, wr, br, downsample,
                       fold_threshold=0))
    assert jnp.allclose(out_uf, ref, rtol=1e-4, atol=1e-4), (
        f"unfolded max abs err {jnp.max(jnp.abs(out_uf - ref))}")

    # --- multi-tile test: exercises the Lp grid axis, halos and tail mask ---
    L2 = 600
    x2 = jax.random.normal(kx2, (1, C_in, L2), dtype=jnp.float32)
    ref2 = dblock_reference(x2, w1, b1, w2, b2, wr, br, downsample)
    out2 = jax.block_until_ready(
        dblock_forward(x2, w1, b1, w2, b2, wr, br, downsample, block_lp=128))
    assert out2.shape == (1, C_out, L2 // downsample)
    assert jnp.allclose(out2, ref2, rtol=1e-4, atol=1e-4), (
        f"tiled max abs err {jnp.max(jnp.abs(out2 - ref2))}")

    print("KERNEL_OK")
</pallas_src>

<mosaic_0001>
module attributes {stable_mosaic.version = 11 : i64} {
  func.func @_dblock_kernel(%arg0: i32, %arg1: i32, %arg2: memref<1x1x4x384xf32, #tpu.memory_space<vmem>>, %arg3: memref<1x1x384xf32, #tpu.memory_space<vmem>>, %arg4: memref<8x12xf32, #tpu.memory_space<vmem>>, %arg5: memref<8x24xf32, #tpu.memory_space<vmem>>, %arg6: memref<8x4xf32, #tpu.memory_space<vmem>>, %arg7: memref<3x8x1xf32, #tpu.memory_space<vmem>>, %arg8: memref<1x8x128xf32, #tpu.memory_space<vmem>>) attributes {dimension_semantics = [#tpu.dimension_semantics<parallel>, #tpu.dimension_semantics<parallel>], iteration_bounds = array<i64: 2, 1>, scalar_prefetch = 0 : i64, scratch_operands = 0 : i64, tpu.core_type = #tpu.core_type<tc>, window_params = [{transform_indices = @transform_0, window_bounds = array<i64: 1, 1, 4, 384>}, {transform_indices = @transform_1, window_bounds = array<i64: 1, 1, 384>}, {pipeline_mode = #tpu.pipeline_mode<synchronous>, transform_indices = @transform_2, window_bounds = array<i64: 8, 12>}, {pipeline_mode = #tpu.pipeline_mode<synchronous>, transform_indices = @transform_3, window_bounds = array<i64: 8, 24>}, {pipeline_mode = #tpu.pipeline_mode<synchronous>, transform_indices = @transform_4, window_bounds = array<i64: 8, 4>}, {pipeline_mode = #tpu.pipeline_mode<synchronous>, transform_indices = @transform_5, window_bounds = array<i64: 3, 8, 1>}, {transform_indices = @transform_6, window_bounds = array<i64: 1, 8, 128>}]} {
    %c0 = arith.constant 0 : index
    %c0_0 = arith.constant 0 : index
    %c0_1 = arith.constant 0 : index
    %c0_2 = arith.constant 0 : index
    %0 = vector.load %arg2[%c0, %c0_0, %c0_1, %c0_2] : memref<1x1x4x384xf32, #tpu.memory_space<vmem>>, vector<1x1x4x384xf32>
    %1 = vector.shape_cast %0 : vector<1x1x4x384xf32> to vector<4x384xf32>
    %c0_3 = arith.constant 0 : index
    %c0_4 = arith.constant 0 : index
    %c0_5 = arith.constant 0 : index
    %2 = vector.load %arg3[%c0_3, %c0_4, %c0_5] : memref<1x1x384xf32, #tpu.memory_space<vmem>>, vector<1x1x384xf32>
    %3 = vector.shape_cast %2 : vector<1x1x384xf32> to vector<1x384xf32>
    %c0_6 = arith.constant 0 : index
    %c0_7 = arith.constant 0 : index
    %c0_8 = arith.constant 0 : index
    %4 = vector.load %arg7[%c0_6, %c0_7, %c0_8] : memref<3x8x1xf32, #tpu.memory_space<vmem>>, vector<1x8x1xf32>
    %5 = vector.shape_cast %4 : vector<1x8x1xf32> to vector<8x1xf32>
    %c1 = arith.constant 1 : index
    %c0_9 = arith.constant 0 : index
    %c0_10 = arith.constant 0 : index
    %6 = vector.load %arg7[%c1, %c0_9, %c0_10] : memref<3x8x1xf32, #tpu.memory_space<vmem>>, vector<1x8x1xf32>
    %7 = vector.shape_cast %6 : vector<1x8x1xf32> to vector<8x1xf32>
    %c2 = arith.constant 2 : index
    %c0_11 = arith.constant 0 : index
    %c0_12 = arith.constant 0 : index
    %8 = vector.load %arg7[%c2, %c0_11, %c0_12] : memref<3x8x1xf32, #tpu.memory_space<vmem>>, vector<1x8x1xf32>
    %9 = vector.shape_cast %8 : vector<1x8x1xf32> to vector<8x1xf32>
    %c0_13 = arith.constant 0 : index
    %c0_14 = arith.constant 0 : index
    %10 = vector.load %arg6[%c0_13, %c0_14] : memref<8x4xf32, #tpu.memory_space<vmem>>, vector<8x4xf32>
    %cst = arith.constant dense<0.000000e+00> : vector<8x384xf32>
    %11 = tpu.matmul %10, %1, %cst {dimension_numbers = #tpu.dot_dimension_numbers<[1], [0], [0], [1], [0, 0, 1, 1], [], []>} : vector<8x4xf32>, vector<4x384xf32>, vector<8x384xf32> -> vector<8x384xf32>
    %12 = vector.broadcast %9 : vector<8x1xf32> to vector<8x384xf32>
    %13 = arith.addf %11, %12 : vector<8x384xf32>
    %cst_15 = arith.constant 0.000000e+00 : f32
    %14 = vector.broadcast %cst_15 : f32 to vector<4x384xf32>
    %15 = arith.maximumf %1, %14 : vector<4x384xf32>
    %c1_i32 = arith.constant 1 : i32
    %16 = tpu.dynamic_rotate %15 by %c1_i32 dim 1 : vector<4x384xf32>, i32 -> vector<4x384xf32>
    %c383_i32 = arith.constant 383 : i32
    %17 = tpu.dynamic_rotate %15 by %c383_i32 dim 1 : vector<4x384xf32>, i32 -> vector<4x384xf32>
    %18 = tpu.concatenate %16, %15, %17 in 0 : vector<4x384xf32>, vector<4x384xf32>, vector<4x384xf32> -> vector<12x384xf32>
    %c0_16 = arith.constant 0 : index
    %c0_17 = arith.constant 0 : index
    %19 = vector.load %arg4[%c0_16, %c0_17] : memref<8x12xf32, #tpu.memory_space<vmem>>, vector<8x12xf32>
    %cst_18 = arith.constant dense<0.000000e+00> : vector<8x384xf32>
    %20 = tpu.matmul %19, %18, %cst_18 {dimension_numbers = #tpu.dot_dimension_numbers<[1], [0], [0], [1], [0, 0, 1, 1], [], []>} : vector<8x12xf32>, vector<12x384xf32>, vector<8x384xf32> -> vector<8x384xf32>
    %21 = vector.broadcast %5 : vector<8x1xf32> to vector<8x384xf32>
    %22 = arith.addf %20, %21 : vector<8x384xf32>
    %cst_19 = arith.constant 0.000000e+00 : f32
    %23 = vector.broadcast %cst_19 : f32 to vector<8x384xf32>
    %24 = arith.maximumf %22, %23 : vector<8x384xf32>
    %25 = vector.broadcast %3 : vector<1x384xf32> to vector<8x384xf32>
    %26 = arith.mulf %24, %25 : vector<8x384xf32>
    %c2_i32 = arith.constant 2 : i32
    %27 = tpu.dynamic_rotate %26 by %c2_i32 dim 1 : vector<8x384xf32>, i32 -> vector<8x384xf32>
    %c382_i32 = arith.constant 382 : i32
    %28 = tpu.dynamic_rotate %26 by %c382_i32 dim 1 : vector<8x384xf32>, i32 -> vector<8x384xf32>
    %29 = tpu.concatenate %27, %26, %28 in 0 : vector<8x384xf32>, vector<8x384xf32>, vector<8x384xf32> -> vector<24x384xf32>
    %c0_20 = arith.constant 0 : index
    %c0_21 = arith.constant 0 : index
    %30 = vector.load %arg5[%c0_20, %c0_21] : memref<8x24xf32, #tpu.memory_space<vmem>>, vector<8x24xf32>
    %cst_22 = arith.constant dense<0.000000e+00> : vector<8x384xf32>
    %31 = tpu.matmul %30, %29, %cst_22 {dimension_numbers = #tpu.dot_dimension_numbers<[1], [0], [0], [1], [0, 0, 1, 1], [], []>} : vector<8x24xf32>, vector<24x384xf32>, vector<8x384xf32> -> vector<8x384xf32>
    %32 = vector.broadcast %7 : vector<8x1xf32> to vector<8x384xf32>
    %33 = arith.addf %31, %32 : vector<8x384xf32>
    %34 = arith.addf %33, %13 : vector<8x384xf32>
    %35 = vector.extract_strided_slice %34 {offsets = [0, 128], sizes = [8, 128], strides = [1, 1]} : vector<8x384xf32> to vector<8x128xf32>
    %c0_23 = arith.constant 0 : index
    %c0_24 = arith.constant 0 : index
    %c0_25 = arith.constant 0 : index
    %36 = vector.load %arg8[%c0_23, %c0_24, %c0_25] : memref<1x8x128xf32, #tpu.memory_space<vmem>>, vector<1x8x128xf32>
    %37 = vector.shape_cast %36 : vector<1x8x128xf32> to vector<8x128xf32>
    %38 = vector.shape_cast %35 : vector<8x128xf32> to vector<1x8x128xf32>
    tpu.vector_store %arg8[%c0_23, %c0_24, %c0_25], %38 {strides = array<i32>} : memref<1x8x128xf32, #tpu.memory_space<vmem>>, vector<1x8x128xf32>,
    return
  }
  func.func @transform_0(%arg0: i32, %arg1: i32) -> (i32, i32, i32, i32) {
    %c0_i32 = arith.constant 0 : i32
    %c0_i32_0 = arith.constant 0 : i32
    %c0_i32_1 = arith.constant 0 : i32
    return %arg0, %arg1, %c0_i32, %c0_i32_0 : i32, i32, i32, i32
  }
  func.func @transform_1(%arg0: i32, %arg1: i32) -> (i32, i32, i32) {
    %c0_i32 = arith.constant 0 : i32
    %c0_i32_0 = arith.constant 0 : i32
    %c0_i32_1 = arith.constant 0 : i32
    return %arg1, %c0_i32, %c0_i32_0 : i32, i32, i32
  }
  func.func @transform_2(%arg0: i32, %arg1: i32) -> (i32, i32) {
    %c0_i32 = arith.constant 0 : i32
    %c0_i32_0 = arith.constant 0 : i32
    %c0_i32_1 = arith.constant 0 : i32
    return %c0_i32, %c0_i32_0 : i32, i32
  }
  func.func @transform_3(%arg0: i32, %arg1: i32) -> (i32, i32) {
    %c0_i32 = arith.constant 0 : i32
    %c0_i32_0 = arith.constant 0 : i32
    %c0_i32_1 = arith.constant 0 : i32
    return %c0_i32, %c0_i32_0 : i32, i32
  }
  func.func @transform_4(%arg0: i32, %arg1: i32) -> (i32, i32) {
    %c0_i32 = arith.constant 0 : i32
    %c0_i32_0 = arith.constant 0 : i32
    %c0_i32_1 = arith.constant 0 : i32
    return %c0_i32, %c0_i32_0 : i32, i32
  }
  func.func @transform_5(%arg0: i32, %arg1: i32) -> (i32, i32, i32) {
    %c0_i32 = arith.constant 0 : i32
    %c0_i32_0 = arith.constant 0 : i32
    %c0_i32_1 = arith.constant 0 : i32
    %c0_i32_2 = arith.constant 0 : i32
    return %c0_i32, %c0_i32_0, %c0_i32_1 : i32, i32, i32
  }
  func.func @transform_6(%arg0: i32, %arg1: i32) -> (i32, i32, i32) {
    %c0_i32 = arith.constant 0 : i32
    %c0_i32_0 = arith.constant 0 : i32
    return %arg0, %c0_i32, %arg1 : i32, i32, i32
  }
}

</mosaic_0001>

<llo_original>
// kernel: tpu_custom_call.1
$region0: #{tpu_custom_call.1}
  #allocation0 [shape = 'u32[]', space=smem, size = 0x4, offset = 0x4, fixed_abs, tag = 'smem constant byte address 0x4 - core index']
  #allocation1 [shape = 'u32[144,128]{1,0:T(1,128)}', space=vmem, size = 0x12000, scoped, tag = 'internal scratch']
  %s0 = inlined_call_operand.vmem [shape: f32[2,1,4,384], index: 0, kind: input, shape index: {}]
  %s1 = inlined_call_operand.hbm [shape: f32[1,1,384], index: 1, kind: input, shape index: {}]
  %s2 = inlined_call_operand.vmem [shape: f32[8,12], index: 2, kind: input, shape index: {}]
  %s3 = inlined_call_operand.vmem [shape: f32[8,24], index: 3, kind: input, shape index: {}]
  %s4 = inlined_call_operand.vmem [shape: f32[8,4], index: 4, kind: input, shape index: {}]
  %s5 = inlined_call_operand.vmem [shape: f32[3,8,1], index: 5, kind: input, shape index: {}]
  %s6 = inlined_call_operand.hbm [shape: f32[2,8,128], index: 6, kind: output, shape index: {}]
  %s7 = sld [smem:[#allocation0]]
  $region61: #{tpu_custom_call.1} parent=0
    _
  %s9 = ssub.s32 1, %s7
  %s10 = scalar_select 0, %s9, %s7
  $region1: #{tpu_custom_call.1} parent=0
    #allocation2 [shape = 'u8[1536]{0}', space=vmem, size = 0x800, scoped, tag = 'input window, operand 1, single buffered']
    #allocation3 [shape = 's32[2]{0}', space=sflag, size = 0x8, scoped, tag = 'scoped memory for tpu_custom_call.1']
    #allocation4 [shape = 's32[2]{0}', space=sflag, size = 0x8, scoped, tag = 'scoped memory for tpu_custom_call.1']
    #allocation5 [shape = 'u8[8192]{0}', space=vmem, size = 0x2000, scoped, tag = 'output window, operand 0']
    %11 = vsyncpa [#allocation3], 0
    %12 = vsyncpa [#allocation4], 0
    %s13 = scalar_lea.sflag [#allocation4], 1
    %14 = vsyncpa %s13, 0
    loop: start=0, step=1, limit=4
    $region2: #{tpu_custom_call.1} parent=1 // loop_pre_header
      _
    $region3: #{tpu_custom_call.1} parent=1 // loop_header
      %s16 = sphi 0, %s20
      %p17 = scmp.ge.s32.totalorder %s16, 4
      %s23 = sphi 0, %s35
      %s24 = sphi 0, %s31
      %s25 = sphi 0, %s23
      %s26 = sphi 0, %s24
      %s27 = sphi 0, %s25
      %s28 = sphi 0, %s26
      %s40 = sphi 0, %s42
      %s43 = sphi 0, %s40
      %s44 = sphi 0, %s43
      %s60 = sphi 0, %s44
      %s66 = sphi 0, %s68
      %s69 = sphi 0, %s66
      %s70 = sphi 0, %s69
      %s86 = sphi 0, %s70
      %s90 = sphi 0, %s90
      %s92 = sphi 0, %s90
      %s93 = sphi 0, %s92
      %s107 = sphi 0, %s93
      %s111 = sphi 0, %s111
      %s113 = sphi 0, %s111
      %s114 = sphi 0, %s113
      %s128 = sphi 0, %s114
      %s132 = sphi 0, %s132
      %s134 = sphi 0, %s132
      %s135 = sphi 0, %s134
      %s149 = sphi 0, %s135
      %s153 = sphi 0, %s153
      %s155 = sphi 0, %s153
      %s156 = sphi 0, %s155
      %s170 = sphi 0, %s156
      %s178 = sphi 0, %s180
      %s181 = sphi 0, %s178
      %s182 = sphi 0, %s181
      %s198 = sphi 0, %s182
    $region4: #{tpu_custom_call.1} parent=1 // loop_header_branch
      %19 = sbr.rel (%p17) target = $region8
    $region5: #{tpu_custom_call.1} parent=1 // loop_body
      %s21 = ssub.s32 %s16, 1
      %s22 = ssub.s32 %s16, 2
      %s29 = sadd.s32 1, %s24
      %p30 = scmp.ge.s32.totalorder %s29, 1
      %s31 = scalar_select %p30, 0, %s29
      %s32 = sadd.s32 1, %s23
      %s33 = scalar_select %p30, %s32, %s23
      %p34 = scmp.ge.s32.totalorder %s33, 2
      %s35 = scalar_select %p34, 0, %s33
      %s36 = ssub.s32 %s23, %s35
      %s37 = ssub.s32 %s24, %s31
      %s38 = sor.u32 %s36, %s37
      %p39 = scmp.eq.s32.totalorder %s38, 0
      %s41 = sadd.s32 %s40, 1
      %s42 = scalar_select %p39, %s40, %s41
      %p45 = pneg %p39
      %p46 = scmp.eq.s32.totalorder %s16, 1
      %p47 = por %p45, %p46
      %p48 = scmp.ne.s32.totalorder %s40, %s43
      %p49 = scmp.eq.s32.totalorder %s16, 0
      %p50 = por %p48, %p49
      %p51 = scmp.ne.s32.totalorder %s40, %s43
      %p52 = scmp.eq.s32.totalorder %s21, 1
      %p53 = por %p51, %p52
      %p54 = scmp.ne.s32.totalorder %s43, %s44
      %p55 = scmp.eq.s32.totalorder %s21, 0
      %p56 = por %p54, %p55
      %p57 = scmp.ne.s32.totalorder %s43, %s44
      %p58 = scmp.eq.s32.totalorder %s22, 1
      %p59 = por %p57, %p58
      %p61 = scmp.ne.s32.totalorder %s44, %s60
      %p62 = scmp.eq.s32.totalorder %s22, 0
      %p63 = por %p61, %p62
      %s64 = ssub.s32 %s24, %s31
      %p65 = scmp.eq.s32.totalorder %s64, 0
      %s67 = sadd.s32 %s66, 1
      %s68 = scalar_select %p65, %s66, %s67
      %p71 = pneg %p65
      %p72 = scmp.eq.s32.totalorder %s16, 1
      %p73 = por %p71, %p72
      %p74 = scmp.ne.s32.totalorder %s66, %s69
      %p75 = scmp.eq.s32.totalorder %s16, 0
      %p76 = por %p74, %p75
      %p77 = scmp.ne.s32.totalorder %s66, %s69
      %p78 = scmp.eq.s32.totalorder %s21, 1
      %p79 = por %p77, %p78
      %p80 = scmp.ne.s32.totalorder %s69, %s70
      %p81 = scmp.eq.s32.totalorder %s21, 0
      %p82 = por %p80, %p81
      %p83 = scmp.ne.s32.totalorder %s69, %s70
      %p84 = scmp.eq.s32.totalorder %s22, 1
      %p85 = por %p83, %p84
      %p87 = scmp.ne.s32.totalorder %s70, %s86
      %p88 = scmp.eq.s32.totalorder %s22, 0
      %p89 = por %p87, %p88
      %s91 = sadd.s32 %s90, 1
      %p94 = scmp.eq.s32.totalorder %s16, 1
      %p95 = scmp.ne.s32.totalorder %s90, %s92
      %p96 = scmp.eq.s32.totalorder %s16, 0
      %p97 = por %p95, %p96
      %p98 = scmp.ne.s32.totalorder %s90, %s92
      %p99 = scmp.eq.s32.totalorder %s21, 1
      %p100 = por %p98, %p99
      %p101 = scmp.ne.s32.totalorder %s92, %s93
      %p102 = scmp.eq.s32.totalorder %s21, 0
      %p103 = por %p101, %p102
      %p104 = scmp.ne.s32.totalorder %s92, %s93
      %p105 = scmp.eq.s32.totalorder %s22, 1
      %p106 = por %p104, %p105
      %p108 = scmp.ne.s32.totalorder %s93, %s107
      %p109 = scmp.eq.s32.totalorder %s22, 0
      %p110 = por %p108, %p109
      %s112 = sadd.s32 %s111, 1
      %p115 = scmp.eq.s32.totalorder %s16, 1
      %p116 = scmp.ne.s32.totalorder %s111, %s113
      %p117 = scmp.eq.s32.totalorder %s16, 0
      %p118 = por %p116, %p117
      %p119 = scmp.ne.s32.totalorder %s111, %s113
      %p120 = scmp.eq.s32.totalorder %s21, 1
      %p121 = por %p119, %p120
      %p122 = scmp.ne.s32.totalorder %s113, %s114
      %p123 = scmp.eq.s32.totalorder %s21, 0
      %p124 = por %p122, %p123
      %p125 = scmp.ne.s32.totalorder %s113, %s114
      %p126 = scmp.eq.s32.totalorder %s22, 1
      %p127 = por %p125, %p126
      %p129 = scmp.ne.s32.totalorder %s114, %s128
      %p130 = scmp.eq.s32.totalorder %s22, 0
      %p131 = por %p129, %p130
      %s133 = sadd.s32 %s132, 1
      %p136 = scmp.eq.s32.totalorder %s16, 1
      %p137 = scmp.ne.s32.totalorder %s132, %s134
      %p138 = scmp.eq.s32.totalorder %s16, 0
      %p139 = por %p137, %p138
      %p140 = scmp.ne.s32.totalorder %s132, %s134
      %p141 = scmp.eq.s32.totalorder %s21, 1
      %p142 = por %p140, %p141
      %p143 = scmp.ne.s32.totalorder %s134, %s135
      %p144 = scmp.eq.s32.totalorder %s21, 0
      %p145 = por %p143, %p144
      %p146 = scmp.ne.s32.totalorder %s134, %s135
      %p147 = scmp.eq.s32.totalorder %s22, 1
      %p148 = por %p146, %p147
      %p150 = scmp.ne.s32.totalorder %s135, %s149
      %p151 = scmp.eq.s32.totalorder %s22, 0
      %p152 = por %p150, %p151
      %s154 = sadd.s32 %s153, 1
      %p157 = scmp.eq.s32.totalorder %s16, 1
      %p158 = scmp.ne.s32.totalorder %s153, %s155
      %p159 = scmp.eq.s32.totalorder %s16, 0
      %p160 = por %p158, %p159
      %p161 = scmp.ne.s32.totalorder %s153, %s155
      %p162 = scmp.eq.s32.totalorder %s21, 1
      %p163 = por %p161, %p162
      %p164 = scmp.ne.s32.totalorder %s155, %s156
      %p165 = scmp.eq.s32.totalorder %s21, 0
      %p166 = por %p164, %p165
      %p167 = scmp.ne.s32.totalorder %s155, %s156
      %p168 = scmp.eq.s32.totalorder %s22, 1
      %p169 = por %p167, %p168
      %p171 = scmp.ne.s32.totalorder %s156, %s170
      %p172 = scmp.eq.s32.totalorder %s22, 0
      %p173 = por %p171, %p172
      %s174 = ssub.s32 %s23, %s35
      %s175 = ssub.s32 %s24, %s31
      %s176 = sor.u32 %s174, %s175
      %p177 = scmp.eq.s32.totalorder %s176, 0
      %s179 = sadd.s32 %s178, 1
      %s180 = scalar_select %p177, %s178, %s179
      %p183 = pneg %p177
      %p184 = scmp.eq.s32.totalorder %s16, 1
      %p185 = por %p183, %p184
      %p186 = scmp.ne.s32.totalorder %s178, %s181
      %p187 = scmp.eq.s32.totalorder %s16, 0
      %p188 = por %p186, %p187
      %p189 = scmp.ne.s32.totalorder %s178, %s181
      %p190 = scmp.eq.s32.totalorder %s21, 1
      %p191 = por %p189, %p190
      %p192 = scmp.ne.s32.totalorder %s181, %s182
      %p193 = scmp.eq.s32.totalorder %s21, 0
      %p194 = por %p192, %p193
      %p195 = scmp.ne.s32.totalorder %s181, %s182
      %p196 = scmp.eq.s32.totalorder %s22, 1
      %p197 = por %p195, %p196
      %p199 = scmp.ne.s32.totalorder %s182, %s198
      %p200 = scmp.eq.s32.totalorder %s22, 0
      %p201 = por %p199, %p200
      %p202 = scmp.le.s32.totalorder 1, %s16
      %p203 = scmp.lt.s32.totalorder %s16, 3
      %p204 = pnand %p202, %p203
      %p205 = pneg %p204
      // Predicated region
      $region9: #{tpu_custom_call.1} parent=5 // pred_check
        _
      $region10: #{tpu_custom_call.1} parent=5 // pred_check_branch
        %207 = sbr.rel (%p204) target = $region12
      $region11: #{tpu_custom_call.1} parent=5 // pred_region
        %s208 = ssub.s32 %s16, 1
        // Predicated region
        $region13: #{tpu_custom_call.1} parent=11 // pred_check
          %p209 = pneg %p82
        $region14: #{tpu_custom_call.1} parent=11 // pred_check_branch
          %211 = sbr.rel (%p209) target = $region16
        $region15: #{tpu_custom_call.1} parent=11 // pred_region
          %s213 = ssub.s32 48, 48
          %214 = vsyncadd [#allocation3], %s213
          %s215 = smul.addr %s26, 3
          %s216 = smul.addr %s215, 16
          %s217 = scalar_lea.hbm %s1, %s216
          %s219 = sshll.u32 [#allocation2], 4
          %s220 = int_to_ptr.vmem [resolvable:$true] %s219
          %222 = dma.hbm_to_vmem [thread:$0]  %s217, 48, %s220, [#allocation3]
        $region16: #{tpu_custom_call.1} parent=11 // pred_fallthru
          _
        // Predicated region
        $region17: #{tpu_custom_call.1} parent=11 // pred_check
          %p223 = pneg %p103
        $region18: #{tpu_custom_call.1} parent=11 // pred_check_branch
          %225 = sbr.rel (%p223) target = $region20
        $region19: #{tpu_custom_call.1} parent=11 // pred_region
          _
        $region20: #{tpu_custom_call.1} parent=11 // pred_fallthru
          _
        // Predicated region
        $region21: #{tpu_custom_call.1} parent=11 // pred_check
          %p226 = pneg %p124
        $region22: #{tpu_custom_call.1} parent=11 // pred_check_branch
          %228 = sbr.rel (%p226) target = $region24
        $region23: #{tpu_custom_call.1} parent=11 // pred_region
          _
        $region24: #{tpu_custom_call.1} parent=11 // pred_fallthru
          _
        // Predicated region
        $region25: #{tpu_custom_call.1} parent=11 // pred_check
          %p229 = pneg %p145
        $region26: #{tpu_custom_call.1} parent=11 // pred_check_branch
          %231 = sbr.rel (%p229) target = $region28
        $region27: #{tpu_custom_call.1} parent=11 // pred_region
          _
        $region28: #{tpu_custom_call.1} parent=11 // pred_fallthru
          _
        // Predicated region
        $region29: #{tpu_custom_call.1} parent=11 // pred_check
          %p232 = pneg %p166
        $region30: #{tpu_custom_call.1} parent=11 // pred_check_branch
          %234 = sbr.rel (%p232) target = $region32
        $region31: #{tpu_custom_call.1} parent=11 // pred_region
          _
        $region32: #{tpu_custom_call.1} parent=11 // pred_fallthru
          _
      $region12: #{tpu_custom_call.1} parent=5 // pred_fallthru
        _
      %p235 = scmp.lt.s32.totalorder %s16, 2
      // Predicated region
      $region33: #{tpu_custom_call.1} parent=5 // pred_check
        %p236 = pneg %p235
      $region34: #{tpu_custom_call.1} parent=5 // pred_check_branch
        %238 = sbr.rel (%p236) target = $region36
      $region35: #{tpu_custom_call.1} parent=5 // pred_region
        // Predicated region
        $region37: #{tpu_custom_call.1} parent=35 // pred_check
          %p239 = pneg %p50
        $region38: #{tpu_custom_call.1} parent=35 // pred_check_branch
          %241 = sbr.rel (%p239) target = $region40
        $region39: #{tpu_custom_call.1} parent=35 // pred_region
          %p242 = scmp.lt.s32.totalorder %s23, 1
          %s243 = scalar_select %p242, %s23, 1
          %p244 = scmp.lt.s32.totalorder %s24, 0
          %s245 = scalar_select %p244, %s24, 0
          %s246 = smul.addr %s245, 3
          %s247 = smul.addr %s243, 3
          %s248 = sadd.s32 %s246, %s247
          %s249 = smul.addr %s248, 4
          %s250 = scalar_lea.vmem %s0, %s249
        $region40: #{tpu_custom_call.1} parent=35 // pred_fallthru
          _
      $region36: #{tpu_custom_call.1} parent=5 // pred_fallthru
        _
      %p251 = scmp.le.s32.totalorder 1, %s16
      %p252 = scmp.lt.s32.totalorder %s16, 3
      %p253 = pnand %p251, %p252
      %p254 = pneg %p253
      // Predicated region
      $region41: #{tpu_custom_call.1} parent=5 // pred_check
        _
      $region42: #{tpu_custom_call.1} parent=5 // pred_check_branch
        %256 = sbr.rel (%p253) target = $region44
      $region43: #{tpu_custom_call.1} parent=5 // pred_region
        %s257 = ssub.s32 %s16, 1
        // Predicated region
        $region45: #{tpu_custom_call.1} parent=43 // pred_check
          %p258 = pneg %p82
        $region46: #{tpu_custom_call.1} parent=43 // pred_check_branch
          %260 = sbr.rel (%p258) target = $region48
        $region47: #{tpu_custom_call.1} parent=43 // pred_region
          %261 = dma.done [#allocation3], 48
        $region48: #{tpu_custom_call.1} parent=43 // pred_fallthru
          _
        %p262 = scmp.lt.s32.totalorder %s25, 1
        %s263 = scalar_select %p262, %s25, 1
        %p264 = scmp.lt.s32.totalorder %s26, 0
        %s265 = scalar_select %p264, %s26, 0
        %s266 = smul.addr %s265, 3
        %s267 = smul.addr %s263, 3
        %s268 = sadd.s32 %s266, %s267
        %s269 = smul.addr %s268, 4
        %s270 = scalar_lea.vmem %s0, %s269
        %p271 = pneg %p56
        %p272 = pneg %p53
        %p273 = pneg %p82
        %p274 = pneg %p79
        %p275 = pneg %p103
        %p276 = pneg %p100
        %p277 = pneg %p124
        %p278 = pneg %p121
        %p279 = pneg %p145
        %p280 = pneg %p142
        %p281 = pneg %p166
        %p282 = pneg %p163
        %p283 = pneg %p194
        %p284 = pneg %p191
        %s285 = sand.u32 %s181, 1
        %s286 = scalar_lea.sflag [#allocation4], %s285
        %s287 = sand.u32 %s181, 1
        %s288 = smul.addr %s287, 8
        %s289 = scalar_lea.vmem [#allocation5], %s288
        %p290 = scmp.lt.s32.totalorder %s25, 1
        %s291 = scalar_select %p290, %s25, 1
        %p292 = scmp.lt.s32.totalorder %s26, 0
        %s293 = scalar_select %p292, %s26, 0
        %s294 = smul.addr %s293, 3
        %s295 = smul.addr %s291, 3
        %s296 = sadd.s32 %s294, %s295
        %s297 = smul.addr %s296, 4
        %s298 = scalar_lea.vmem %s0, %s297
        %v299 = vld [vmem:[%s298] sm:$0xff]
        %v300 = vld [vmem:[%s298 + $0x8] sm:$0xf]
        %v301 = vld [vmem:[#allocation2] sm:$0x7]
        %v302 = vld [vmem:[%s5] sm:$0xff]
        %s303 = scalar_lea.vmem %s5, 8
        %v304 = vld [vmem:[%s303] sm:$0xff]
        %s305 = scalar_lea.vmem %s5, 16
        %v306 = vld [vmem:[%s305] sm:$0xff]
        %v307 = vld [vmem:[%s4] sm:$0xff]
        %309 = vset.pattern.permute.xlu0 0
        %310 = vperm.xlu0 %309, %v306
        %v311 = vpop.permute.xlu0 %310
        %v314 = vcombine.high %v299, %v299
        %vm315 = vcmask 31744
        %v317 = vsel %vm315, %v307, 0
        %vm319 = vcmask 1043456
        %v320 = vsel %vm319, %v299, 0
        %v322 = vsel %vm319, %v314, 0
        %324 = vmatprep.subr.mxu0 %v322
        %325 = vmatpush1.msra.mxu0 %v320
        %326 = vmatprep.subr.mxu0 0.0
        %327 = vmatpush1.msra.mxu0 0.0
        %328 = vmatprep.subr.mxu0 0.0
        %329 = vmatpush1.msra.mxu0 0.0
        %330 = vmatprep.subr.mxu0 0.0
        %331 = vmatpush1.msra.mxu0 0.0
        %332 = vmatprep.subr.mxu0 0.0
        %333 = vmatpush1.msra.mxu0 0.0
        %334 = vmatprep.subr.mxu0 0.0
        %335 = vmatpush1.msra.mxu0 0.0
        %336 = vmatprep.subr.mxu0 0.0
        %337 = vmatpush1.msra.mxu0 0.0
        %338 = vmatprep.subr.mxu0 0.0
        %339 = vmatpush1.msra.mxu0 0.0
        %340 = vmatprep.subr.mxu0 0.0
        %341 = vmatpush1.msra.mxu0 0.0
        %342 = vmatprep.subr.mxu0 0.0
        %343 = vmatpush1.msra.mxu0 0.0
        %344 = vmatprep.subr.mxu0 0.0
        %345 = vmatpush1.msra.mxu0 0.0
        %346 = vmatprep.subr.mxu0 0.0
        %347 = vmatpush1.msra.mxu0 0.0
        %348 = vmatprep.subr.mxu0 0.0
        %349 = vmatpush1.msra.mxu0 0.0
        %350 = vmatprep.subr.mxu0 0.0
        %351 = vmatpush1.msra.mxu0 0.0
        %352 = vmatprep.subr.mxu0 0.0
        %353 = vmatpush1.msra.mxu0 0.0
        %354 = vmatprep.subr.mxu0 0.0
        %355 = vmatpush1.msra.mxu0 0.0
        %356 = vmatprep.subr.mxu0 0.0
        %357 = vmatpush1.msra.mxu0 0.0
        %358 = vmatprep.subr.mxu0 0.0
        %359 = vmatpush1.msra.mxu0 0.0
        %360 = vmatprep.subr.mxu0 0.0
        %361 = vmatpush1.msra.mxu0 0.0
        %362 = vmatprep.subr.mxu0 0.0
        %363 = vmatpush1.msra.mxu0 0.0
        %364 = vmatprep.subr.mxu0 0.0
        %365 = vmatpush1.msra.mxu0 0.0
        %366 = vmatprep.subr.mxu0 0.0
        %367 = vmatpush1.msra.mxu0 0.0
        %368 = vmatprep.subr.mxu0 0.0
        %369 = vmatpush1.msra.mxu0 0.0
        %370 = vmatprep.subr.mxu0 0.0
        %371 = vmatpush1.msra.mxu0 0.0
        %372 = vmatprep.subr.mxu0 0.0
        %373 = vmatpush1.msra.mxu0 0.0
        %374 = vmatprep.subr.mxu0 0.0
        %375 = vmatpush1.msra.mxu0 0.0
        %376 = vmatprep.subr.mxu0 0.0
        %377 = vmatpush1.msra.mxu0 0.0
        %378 = vmatprep.subr.mxu0 0.0
        %379 = vmatpush1.msra.mxu0 0.0
        %380 = vmatprep.subr.mxu0 0.0
        %381 = vmatpush1.msra.mxu0 0.0
        %382 = vmatprep.subr.mxu0 0.0
        %383 = vmatpush1.msra.mxu0 0.0
        %384 = vmatprep.subr.mxu0 0.0
        %385 = vmatpush1.msra.mxu0 0.0
        %386 = vmatprep.subr.mxu0 0.0
        %387 = vmatpush1.msra.mxu0 0.0
        %388 = vmatprep.mubr.f32.mxu0 0.0
        %389 = vmatmul.mubr.f32.gmra.mrb[0].mxu0 %v317
        %v390 = vpop.f32.mrb[0].mxu0
        %v391 = vpop.f32.mrb[0].mxu0
        %v392 = vadd.f32 %v311, %v391
        %393 = vdwg.mxu0
        %v394 = vmax.f32 %v299, 0.0
        %v395 = vmax.f32 %v300, 0.0
        %v398 = vcombine.high %v394, %v394
        %400 = vrot.lane.b32.xlu0 %v394, 1
        %v401 = vpop.permute.xlu0 %400
        %402 = vrot.lane.b32.xlu0 %v398, 1
        %v403 = vpop.permute.xlu0 %402
        %404 = vrot.lane.b32.xlu0 %v395, 1
        %v405 = vpop.permute.xlu0 %404
        %v406 = vlaneseq
        %v407 = vand.u32 %v406, 127
        %vm408 = vcmp.lt.s32.totalorder %v407, 1
        %v409 = vsel %vm408, %v403, %v405
        %v410 = vsel %vm408, %v401, %v403
        %v411 = vsel %vm408, %v405, %v401
        %412 = vrot.lane.b32.xlu0 %v394, 127
        %v413 = vpop.permute.xlu0 %412
        %414 = vrot.lane.b32.xlu0 %v398, 127
        %v415 = vpop.permute.xlu0 %414
        %416 = vrot.lane.b32.xlu0 %v395, 127
        %v417 = vpop.permute.xlu0 %416
        %vm418 = vcmp.lt.s32.totalorder %v407, 127
        %v419 = vsel %vm418, %v415, %v417
        %v420 = vsel %vm418, %v413, %v415
        %v421 = vsel %vm418, %v417, %v413
        %v422 = vcombine.low %v394, %v394
        %v423 = vcombine.low %v395, %v395
        %v426 = vsel %vm319, %v411, %v422
        %v427 = vsel %vm319, %v410, %v394
        %v428 = vsel %vm319, %v409, %v423
        %v429 = vld [vmem:[%s2] sm:$0xff]
        %431 = vset.pattern.permute.xlu0 0
        %432 = vperm.xlu0 %431, %v302
        %v433 = vpop.permute.xlu0 %432
        %vm435 = vcmask 97280
        %v437 = vsel %vm435, %v429, 0
        %v440 = vsel %vm319, %v420, 0
        %v443 = vsel %vm319, %v419, 0
        %v446 = vsel %vm319, %v421, 0
        %448 = vmatprep.subr.mxu0 %v427
        %449 = vmatpush1.msra.mxu0 %v426
        %450 = vmatprep.subr.mxu0 %v443
        %451 = vmatpush1.msra.mxu0 %v440
        %452 = vmatprep.subr.mxu0 0.0
        %453 = vmatpush1.msra.mxu0 0.0
        %454 = vmatprep.subr.mxu0 0.0
        %455 = vmatpush1.msra.mxu0 0.0
        %456 = vmatprep.subr.mxu0 0.0
        %457 = vmatpush1.msra.mxu0 0.0
        %458 = vmatprep.subr.mxu0 0.0
        %459 = vmatpush1.msra.mxu0 0.0
        %460 = vmatprep.subr.mxu0 0.0
        %461 = vmatpush1.msra.mxu0 0.0
        %462 = vmatprep.subr.mxu0 0.0
        %463 = vmatpush1.msra.mxu0 0.0
        %464 = vmatprep.subr.mxu0 0.0
        %465 = vmatpush1.msra.mxu0 0.0
        %466 = vmatprep.subr.mxu0 0.0
        %467 = vmatpush1.msra.mxu0 0.0
        %468 = vmatprep.subr.mxu0 0.0
        %469 = vmatpush1.msra.mxu0 0.0
        %470 = vmatprep.subr.mxu0 0.0
        %471 = vmatpush1.msra.mxu0 0.0
        %472 = vmatprep.subr.mxu0 0.0
        %473 = vmatpush1.msra.mxu0 0.0
        %474 = vmatprep.subr.mxu0 0.0
        %475 = vmatpush1.msra.mxu0 0.0
        %476 = vmatprep.subr.mxu0 0.0
        %477 = vmatpush1.msra.mxu0 0.0
        %478 = vmatprep.subr.mxu0 0.0
        %479 = vmatpush1.msra.mxu0 0.0
        %480 = vmatprep.subr.mxu0 0.0
        %481 = vmatpush1.msra.mxu0 0.0
        %482 = vmatprep.subr.mxu0 0.0
        %483 = vmatpush1.msra.mxu0 0.0
        %484 = vmatprep.subr.mxu0 0.0
        %485 = vmatpush1.msra.mxu0 0.0
        %486 = vmatprep.subr.mxu0 0.0
        %487 = vmatpush1.msra.mxu0 0.0
        %488 = vmatprep.subr.mxu0 0.0
        %489 = vmatpush1.msra.mxu0 0.0
        %490 = vmatprep.subr.mxu0 0.0
        %491 = vmatpush1.msra.mxu0 0.0
        %492 = vmatprep.subr.mxu0 0.0
        %493 = vmatpush1.msra.mxu0 0.0
        %494 = vmatprep.subr.mxu0 0.0
        %495 = vmatpush1.msra.mxu0 0.0
        %496 = vmatprep.subr.mxu0 0.0
        %497 = vmatpush1.msra.mxu0 0.0
        %498 = vmatprep.subr.mxu0 0.0
        %499 = vmatpush1.msra.mxu0 0.0
        %500 = vmatprep.subr.mxu0 0.0
        %501 = vmatpush1.msra.mxu0 0.0
        %502 = vmatprep.subr.mxu0 0.0
        %503 = vmatpush1.msra.mxu0 0.0
        %504 = vmatprep.subr.mxu0 0.0
        %505 = vmatpush1.msra.mxu0 0.0
        %506 = vmatprep.subr.mxu0 0.0
        %507 = vmatpush1.msra.mxu0 0.0
        %508 = vmatprep.subr.mxu0 0.0
        %509 = vmatpush1.msra.mxu0 0.0
        %510 = vmatprep.subr.mxu0 0.0
        %511 = vmatpush1.msra.mxu0 0.0
        %512 = vmatprep.mubr.f32.mxu0 0.0
        %513 = vmatmul.mubr.f32.gmra.mrb[0].mxu0 %v437
        %v514 = vpop.f32.mrb[0].mxu0
        %v515 = vadd.f32 %v433, %v514
        %v516 = vpop.f32.mrb[0].mxu0
        %v517 = vadd.f32 %v433, %v516
        %518 = vdwg.mxu0
        %519 = vmatprep.subr.mxu0 0.0
        %520 = vmatpush1.msra.mxu0 %v428
        %521 = vmatprep.subr.mxu0 0.0
        %522 = vmatpush1.msra.mxu0 %v446
        %523 = vmatprep.subr.mxu0 0.0
        %524 = vmatpush1.msra.mxu0 0.0
        %525 = vmatprep.subr.mxu0 0.0
        %526 = vmatpush1.msra.mxu0 0.0
        %527 = vmatprep.subr.mxu0 0.0
        %528 = vmatpush1.msra.mxu0 0.0
        %529 = vmatprep.subr.mxu0 0.0
        %530 = vmatpush1.msra.mxu0 0.0
        %531 = vmatprep.subr.mxu0 0.0
        %532 = vmatpush1.msra.mxu0 0.0
        %533 = vmatprep.subr.mxu0 0.0
        %534 = vmatpush1.msra.mxu0 0.0
        %535 = vmatprep.subr.mxu0 0.0
        %536 = vmatpush1.msra.mxu0 0.0
        %537 = vmatprep.subr.mxu0 0.0
        %538 = vmatpush1.msra.mxu0 0.0
        %539 = vmatprep.subr.mxu0 0.0
        %540 = vmatpush1.msra.mxu0 0.0
        %541 = vmatprep.subr.mxu0 0.0
        %542 = vmatpush1.msra.mxu0 0.0
        %543 = vmatprep.subr.mxu0 0.0
        %544 = vmatpush1.msra.mxu0 0.0
        %545 = vmatprep.subr.mxu0 0.0
        %546 = vmatpush1.msra.mxu0 0.0
        %547 = vmatprep.subr.mxu0 0.0
        %548 = vmatpush1.msra.mxu0 0.0
        %549 = vmatprep.subr.mxu0 0.0
        %550 = vmatpush1.msra.mxu0 0.0
        %551 = vmatprep.subr.mxu0 0.0
        %552 = vmatpush1.msra.mxu0 0.0
        %553 = vmatprep.subr.mxu0 0.0
        %554 = vmatpush1.msra.mxu0 0.0
        %555 = vmatprep.subr.mxu0 0.0
        %556 = vmatpush1.msra.mxu0 0.0
        %557 = vmatprep.subr.mxu0 0.0
        %558 = vmatpush1.msra.mxu0 0.0
        %559 = vmatprep.subr.mxu0 0.0
        %560 = vmatpush1.msra.mxu0 0.0
        %561 = vmatprep.subr.mxu0 0.0
        %562 = vmatpush1.msra.mxu0 0.0
        %563 = vmatprep.subr.mxu0 0.0
        %564 = vmatpush1.msra.mxu0 0.0
        %565 = vmatprep.subr.mxu0 0.0
        %566 = vmatpush1.msra.mxu0 0.0
        %567 = vmatprep.subr.mxu0 0.0
        %568 = vmatpush1.msra.mxu0 0.0
        %569 = vmatprep.subr.mxu0 0.0
        %570 = vmatpush1.msra.mxu0 0.0
        %571 = vmatprep.subr.mxu0 0.0
        %572 = vmatpush1.msra.mxu0 0.0
        %573 = vmatprep.subr.mxu0 0.0
        %574 = vmatpush1.msra.mxu0 0.0
        %575 = vmatprep.subr.mxu0 0.0
        %576 = vmatpush1.msra.mxu0 0.0
        %577 = vmatprep.subr.mxu0 0.0
        %578 = vmatpush1.msra.mxu0 0.0
        %579 = vmatprep.subr.mxu0 0.0
        %580 = vmatpush1.msra.mxu0 0.0
        %581 = vmatprep.subr.mxu0 0.0
        %582 = vmatpush1.msra.mxu0 0.0
        %583 = vmatprep.mubr.f32.mxu0 0.0
        %584 = vmatmul.mubr.f32.gmra.mrb[0].mxu0 %v437
        %v585 = vpop.f32.mrb[0].mxu0
        %v586 = vadd.f32 %v433, %v585
        %v587 = vpop.f32.mrb[0].mxu0
        %588 = vdwg.mxu0
        %v589 = vmax.f32 %v515, 0.0
        %v590 = vmax.f32 %v517, 0.0
        %v591 = vmax.f32 %v586, 0.0
        %v593 = vlaneseq
        %v594 = vshrl.u32 %v593, 7
        %v595 = vsub.s32 0, %v594
        %v596 = vrot.slane %v301, %v595
        %v597 = vlaneseq
        %v598 = vshrl.u32 %v597, 7
        %v599 = vsub.s32 1, %v598
        %v600 = vrot.slane %v301, %v599
        %v601 = vlaneseq
        %v602 = vshrl.u32 %v601, 7
        %v603 = vsub.s32 2, %v602
        %v604 = vrot.slane %v301, %v603
        %v608 = vmul.f32 %v589, %v596
        %v609 = vmul.f32 %v590, %v600
        %v610 = vmul.f32 %v591, %v604
        %611 = vrot.lane.b32.xlu0 %v608, 2
        %v612 = vpop.permute.xlu0 %611
        %613 = vrot.lane.b32.xlu0 %v609, 2
        %v614 = vpop.permute.xlu0 %613
        %615 = vrot.lane.b32.xlu0 %v610, 2
        %v616 = vpop.permute.xlu0 %615
        %vm617 = vcmp.lt.s32.totalorder %v407, 2
        %v618 = vsel %vm617, %v612, %v614
        %v619 = vsel %vm617, %v616, %v612
        %620 = vrot.lane.b32.xlu0 %v608, 126
        %v621 = vpop.permute.xlu0 %620
        %622 = vrot.lane.b32.xlu0 %v609, 126
        %v623 = vpop.permute.xlu0 %622
        %624 = vrot.lane.b32.xlu0 %v610, 126
        %v625 = vpop.permute.xlu0 %624
        %vm626 = vcmp.lt.s32.totalorder %v407, 126
        %v627 = vsel %vm626, %v623, %v625
        %v628 = vsel %vm626, %v621, %v623
        %v629 = vld [vmem:[%s3] sm:$0xff]
        %631 = vset.pattern.permute.xlu0 0
        %632 = vperm.xlu0 %631, %v304
        %v633 = vpop.permute.xlu0 %632
        %vm635 = vcmask 195584
        %v637 = vsel %vm635, %v629, 0
        %639 = vmatprep.subr.mxu0 %v618
        %640 = vmatpush1.msra.mxu0 %v619
        %641 = vmatprep.subr.mxu0 %v609
        %642 = vmatpush1.msra.mxu0 %v608
        %643 = vmatprep.subr.mxu0 %v627
        %644 = vmatpush1.msra.mxu0 %v628
        %645 = vmatprep.subr.mxu0 0.0
        %646 = vmatpush1.msra.mxu0 0.0
        %647 = vmatprep.subr.mxu0 0.0
        %648 = vmatpush1.msra.mxu0 0.0
        %649 = vmatprep.subr.mxu0 0.0
        %650 = vmatpush1.msra.mxu0 0.0
        %651 = vmatprep.subr.mxu0 0.0
        %652 = vmatpush1.msra.mxu0 0.0
        %653 = vmatprep.subr.mxu0 0.0
        %654 = vmatpush1.msra.mxu0 0.0
        %655 = vmatprep.subr.mxu0 0.0
        %656 = vmatpush1.msra.mxu0 0.0
        %657 = vmatprep.subr.mxu0 0.0
        %658 = vmatpush1.msra.mxu0 0.0
        %659 = vmatprep.subr.mxu0 0.0
        %660 = vmatpush1.msra.mxu0 0.0
        %661 = vmatprep.subr.mxu0 0.0
        %662 = vmatpush1.msra.mxu0 0.0
        %663 = vmatprep.subr.mxu0 0.0
        %664 = vmatpush1.msra.mxu0 0.0
        %665 = vmatprep.subr.mxu0 0.0
        %666 = vmatpush1.msra.mxu0 0.0
        %667 = vmatprep.subr.mxu0 0.0
        %668 = vmatpush1.msra.mxu0 0.0
        %669 = vmatprep.subr.mxu0 0.0
        %670 = vmatpush1.msra.mxu0 0.0
        %671 = vmatprep.subr.mxu0 0.0
        %672 = vmatpush1.msra.mxu0 0.0
        %673 = vmatprep.subr.mxu0 0.0
        %674 = vmatpush1.msra.mxu0 0.0
        %675 = vmatprep.subr.mxu0 0.0
        %676 = vmatpush1.msra.mxu0 0.0
        %677 = vmatprep.subr.mxu0 0.0
        %678 = vmatpush1.msra.mxu0 0.0
        %679 = vmatprep.subr.mxu0 0.0
        %680 = vmatpush1.msra.mxu0 0.0
        %681 = vmatprep.subr.mxu0 0.0
        %682 = vmatpush1.msra.mxu0 0.0
        %683 = vmatprep.subr.mxu0 0.0
        %684 = vmatpush1.msra.mxu0 0.0
        %685 = vmatprep.subr.mxu0 0.0
        %686 = vmatpush1.msra.mxu0 0.0
        %687 = vmatprep.subr.mxu0 0.0
        %688 = vmatpush1.msra.mxu0 0.0
        %689 = vmatprep.subr.mxu0 0.0
        %690 = vmatpush1.msra.mxu0 0.0
        %691 = vmatprep.subr.mxu0 0.0
        %692 = vmatpush1.msra.mxu0 0.0
        %693 = vmatprep.subr.mxu0 0.0
        %694 = vmatpush1.msra.mxu0 0.0
        %695 = vmatprep.subr.mxu0 0.0
        %696 = vmatpush1.msra.mxu0 0.0
        %697 = vmatprep.subr.mxu0 0.0
        %698 = vmatpush1.msra.mxu0 0.0
        %699 = vmatprep.subr.mxu0 0.0
        %700 = vmatpush1.msra.mxu0 0.0
        %701 = vmatprep.subr.mxu0 0.0
        %702 = vmatpush1.msra.mxu0 0.0
        %703 = vmatprep.mubr.f32.mxu0 0.0
        %704 = vmatmul.mubr.f32.gmra.mrb[0].mxu0 %v637
        %v705 = vpop.f32.mrb[0].mxu0
        %v706 = vpop.f32.mrb[0].mxu0
        %v707 = vadd.f32 %v633, %v706
        %708 = vdwg.mxu0
        %v709 = vadd.f32 %v707, %v392
        %710 = vst [vmem:[%s289] sm:$0xff] %v709
        %s711 = sand.u32 %s181, 1
        %s712 = scalar_lea.sflag [#allocation4], %s711
        %s713 = sand.u32 %s181, 1
        %s714 = smul.addr %s713, 8
        %s715 = scalar_lea.vmem [#allocation5], %s714
        // Predicated region
        $region49: #{tpu_custom_call.1} parent=43 // pred_check
          %p716 = pneg %p191
        $region50: #{tpu_custom_call.1} parent=43 // pred_check_branch
          %718 = sbr.rel (%p716) target = $region52
        $region51: #{tpu_custom_call.1} parent=43 // pred_region
          %s720 = ssub.s32 128, 128
          %721 = vsyncadd %s712, %s720
          %s722 = sadd.s32 %s26, %s25
          %s723 = smul.addr %s722, 128
          %s724 = scalar_lea.hbm %s6, %s723
          %s726 = sshll.u32 %s715, 4
          %s727 = int_to_ptr.vmem [resolvable:$true] %s726
          %729 = dma.vmem_to_hbm [thread:$0]  %s727, 128, %s724, %s712
        $region52: #{tpu_custom_call.1} parent=43 // pred_fallthru
          _
      $region44: #{tpu_custom_call.1} parent=5 // pred_fallthru
        _
      %p730 = scmp.le.s32.totalorder 2, %s16
      // Predicated region
      $region53: #{tpu_custom_call.1} parent=5 // pred_check
        %p731 = pneg %p730
      $region54: #{tpu_custom_call.1} parent=5 // pred_check_branch
        %733 = sbr.rel (%p731) target = $region56
      $region55: #{tpu_custom_call.1} parent=5 // pred_region
        %s734 = ssub.s32 %s16, 2
        // Predicated region
        $region57: #{tpu_custom_call.1} parent=55 // pred_check
          %p735 = pneg %p197
        $region58: #{tpu_custom_call.1} parent=55 // pred_check_branch
          %737 = sbr.rel (%p735) target = $region60
        $region59: #{tpu_custom_call.1} parent=55 // pred_region
          %s738 = sand.u32 %s182, 1
          %s739 = scalar_lea.sflag [#allocation4], %s738
          %s740 = sand.u32 %s182, 1
          %s741 = smul.addr %s740, 8
          %s742 = scalar_lea.vmem [#allocation5], %s741
          %743 = dma.done %s739, 128
        $region60: #{tpu_custom_call.1} parent=55 // pred_fallthru
          _
      $region56: #{tpu_custom_call.1} parent=5 // pred_fallthru
        _
    $region6: #{tpu_custom_call.1} parent=1 // loop_footer
      %s20 = sadd.s32 1, %s16
    $region7: #{tpu_custom_call.1} parent=1 // loop_footer_branch
      %15 = sbr.rel target = $region3
    $region8: #{tpu_custom_call.1} parent=1 // loop_exit
      _
    %744 = vsyncpa [#allocation3], 1
    %s745 = scalar_lea.sflag [#allocation3], 1
    %746 = vsyncpa %s745, 1
    %747 = vsyncpa [#allocation4], 1
    %s748 = scalar_lea.sflag [#allocation4], 1
    %749 = vsyncpa %s748, 1

</llo_original>
